<compile_context>
chip_gen: v7x
topology: tpu7x:2x2x1
jax: 0.10.0
libtpu: 0.0.40
codegen_flags: <defaults>
</compile_context>

<pallas_src>
import functools

import jax
import jax.numpy as jnp
from jax.experimental import pallas as pl
from jax.experimental.pallas import tpu as pltpu


# ---------------------------------------------------------------------------
# Tiling helper
# ---------------------------------------------------------------------------
def _pick_pixel_tile(num_pixels, target):
    """Pixel (lane) tile: full extent if small, else a multiple of 128 <= target."""
    if num_pixels <= target:
        return num_pixels                 # full-extent block satisfies the (8,128) rule
    return max((target // 128) * 128, 128)


# ---------------------------------------------------------------------------
# Pallas kernel 1: per-stage 1x1 conv (BN folded) + ReLU, transposed layout
#   x_ref:     (cin,  tp)  bf16     w_ref: (cout, cin) bf16
#   shift_ref: (cout, 1)   f32      o_ref: (cout, tp)  bf16
# ---------------------------------------------------------------------------
def _stage_conv_kernel(x_ref, w_ref, shift_ref, o_ref):
    acc = jnp.dot(w_ref[...], x_ref[...], preferred_element_type=jnp.float32)
    y = jnp.maximum(acc + shift_ref[...], 0.0)
    o_ref[...] = y.astype(o_ref.dtype)


def stage_conv(x_nchw, w_folded, shift, *, compute_dtype=jnp.bfloat16,
               tile_pixels=1024):
    """ReLU(BN(Conv1x1(x))) with BN folded into `w_folded` (cout, cin)."""
    N, cin, h, w = x_nchw.shape
    cout = w_folded.shape[0]
    P = h * w
    x3 = x_nchw.reshape(N, cin, P).astype(compute_dtype)   # reshape only, no transpose
    tp = _pick_pixel_tile(P, tile_pixels)
    grid = (N, pl.cdiv(P, tp))

    out = pl.pallas_call(
        _stage_conv_kernel,
        out_shape=jax.ShapeDtypeStruct((N, cout, P), compute_dtype),
        grid=grid,
        in_specs=[
            pl.BlockSpec((None, cin, tp), lambda b, j: (b, 0, j)),
            pl.BlockSpec((cout, cin), lambda b, j: (0, 0)),
            pl.BlockSpec((cout, 1), lambda b, j: (0, 0)),
        ],
        out_specs=pl.BlockSpec((None, cout, tp), lambda b, j: (b, 0, j)),
        compiler_params=pltpu.CompilerParams(
            dimension_semantics=("parallel", "parallel"),
            vmem_limit_bytes=32 * 1024 * 1024),
    )(x3, w_folded.astype(compute_dtype),
      shift.reshape(cout, 1).astype(jnp.float32))
    return out.reshape(N, cout, h, w)


# ---------------------------------------------------------------------------
# Pallas kernel 2: fusion conv (concat decomposed into per-stage matmul sum)
#                  + ReLU + classifier conv, all in one kernel.
#   refs = y_0..y_{S-1} (C, tp) bf16, Wf_0..Wf_{S-1} (C, C) bf16,
#          shift_f (C, 1) f32, Wc (K, C) bf16, bc (K, 1) f32, o_ref (K, tp) f32
# ---------------------------------------------------------------------------
def _fusion_cls_kernel(*refs, num_stages):
    y_refs = refs[:num_stages]
    wf_refs = refs[num_stages:2 * num_stages]
    shift_ref, wc_ref, bc_ref, o_ref = refs[2 * num_stages:]

    acc = jnp.dot(wf_refs[0][...], y_refs[0][...],
                  preferred_element_type=jnp.float32)
    for i in range(1, num_stages):
        acc = acc + jnp.dot(wf_refs[i][...], y_refs[i][...],
                            preferred_element_type=jnp.float32)
    h = jnp.maximum(acc + shift_ref[...], 0.0)            # fused activation, VMEM only
    logits = jnp.dot(wc_ref[...], h.astype(wc_ref.dtype),
                     preferred_element_type=jnp.float32)
    o_ref[...] = (logits + bc_ref[...]).astype(o_ref.dtype)


def fusion_cls_head(ys, wf_slices, shift_f, wc, bc, *, compute_dtype=jnp.bfloat16,
                    tile_pixels=1024):
    """logits = Wc @ relu(sum_i Wf_i @ y_i + shift_f) + bc, written straight to NCHW."""
    S = len(ys)
    N, C, H0, W0 = ys[0].shape
    P = H0 * W0
    num_classes = wc.shape[0]
    y_flat = [y.reshape(N, C, P).astype(compute_dtype) for y in ys]
    tp = _pick_pixel_tile(P, tile_pixels)
    grid = (N, pl.cdiv(P, tp))

    y_specs = [pl.BlockSpec((None, C, tp), lambda b, j: (b, 0, j)) for _ in range(S)]
    wf_specs = [pl.BlockSpec((C, C), lambda b, j: (0, 0)) for _ in range(S)]
    tail_specs = [
        pl.BlockSpec((C, 1), lambda b, j: (0, 0)),                # shift_f
        pl.BlockSpec((num_classes, C), lambda b, j: (0, 0)),      # Wc
        pl.BlockSpec((num_classes, 1), lambda b, j: (0, 0)),      # bc
    ]

    out = pl.pallas_call(
        functools.partial(_fusion_cls_kernel, num_stages=S),
        out_shape=jax.ShapeDtypeStruct((N, num_classes, P), jnp.float32),
        grid=grid,
        in_specs=y_specs + wf_specs + tail_specs,
        out_specs=pl.BlockSpec((None, num_classes, tp), lambda b, j: (b, 0, j)),
        compiler_params=pltpu.CompilerParams(
            dimension_semantics=("parallel", "parallel"),
            vmem_limit_bytes=32 * 1024 * 1024),
    )(*y_flat,
      *[wf.astype(compute_dtype) for wf in wf_slices],
      shift_f.reshape(C, 1).astype(jnp.float32),
      wc.astype(compute_dtype),
      bc.reshape(num_classes, 1).astype(jnp.float32))
    return out.reshape(N, num_classes, H0, W0)


# ---------------------------------------------------------------------------
# Parameter construction (deterministic, synthetic), BN folded into the weights
# ---------------------------------------------------------------------------
def _init_conv_bn_folded(key, cin, cout):
    """Conv2d(cin, cout, 1, bias=False) + BatchNorm2d(cout), BN folded into W."""
    k1, k2, k3, k4, k5 = jax.random.split(key, 5)
    w = jax.random.normal(k1, (cout, cin), jnp.float32) * 0.05   # (cout, cin) conv layout
    gamma = 1.0 + 0.1 * jax.random.normal(k2, (cout,), jnp.float32)
    beta = 0.1 * jax.random.normal(k3, (cout,), jnp.float32)
    run_mean = 0.1 * jax.random.normal(k4, (cout,), jnp.float32)
    run_var = jnp.abs(jax.random.normal(k5, (cout,), jnp.float32)) + 0.5
    eps = 1e-5
    scale = gamma / jnp.sqrt(run_var + eps)
    shift = beta - run_mean * scale
    # scale * (W @ x) == (scale[:, None] * W) @ x  -> fold scale into W exactly.
    return w * scale[:, None], shift


def init_hard_mask_decoder_params(key, in_channels, channels, num_classes):
    S = len(in_channels)
    ks = jax.random.split(key, S + 2)
    convs = [_init_conv_bn_folded(ks[i], cin, channels)
             for i, cin in enumerate(in_channels)]
    wf, shift_f = _init_conv_bn_folded(ks[S], channels * S, channels)
    # Split the fusion weight by stage so the channel concat never materializes:
    #   Wf @ concat(y_0..y_{S-1}) == sum_i Wf[:, i*C:(i+1)*C] @ y_i
    wf_slices = [wf[:, i * channels:(i + 1) * channels] for i in range(S)]
    kc1, kc2 = jax.random.split(ks[S + 1])
    wc = jax.random.normal(kc1, (num_classes, channels), jnp.float32) * 0.05
    bc = 0.1 * jax.random.normal(kc2, (num_classes,), jnp.float32)
    return {"convs": convs, "fusion": (wf_slices, shift_f), "cls": (wc, bc)}


# ---------------------------------------------------------------------------
# Forward pass (HardMaskDecoder.forward == SegformerHead.forward, eval mode)
# ---------------------------------------------------------------------------
def hard_mask_decoder_forward(inputs_nchw, params, *, compute_dtype=jnp.bfloat16,
                              tile_pixels=1024):
    N = inputs_nchw[0].shape[0]
    H0, W0 = inputs_nchw[0].shape[2], inputs_nchw[0].shape[3]

    ys = []
    for (w, shift), x in zip(params["convs"], inputs_nchw):
        y = stage_conv(x, w, shift, compute_dtype=compute_dtype,
                       tile_pixels=tile_pixels)             # (N, C, h, w), bf16, NCHW
        if y.shape[2:] != (H0, W0):
            # TODO(synk): the 4-tap half-pixel bilinear gather could be folded into
            # the stage kernel; for now it is plain-JAX resize, kept in bf16 to
            # halve its HBM traffic (align_corners=False semantics match mmseg).
            y = jax.image.resize(y, (N, y.shape[1], H0, W0), method="bilinear")
        ys.append(y)

    wf_slices, shift_f = params["fusion"]
    wc, bc = params["cls"]
    # Dropout2d(p=0.1) is the identity at inference time.
    logits = fusion_cls_head(ys, wf_slices, shift_f, wc, bc,
                             compute_dtype=compute_dtype, tile_pixels=tile_pixels)
    return logits                                           # already (N, num_classes, H0, W0)


# ---------------------------------------------------------------------------
# Pure-JAX f32 reference (same folded params) for a sanity check
# ---------------------------------------------------------------------------
def reference_forward_f32(inputs_nchw, params):
    N = inputs_nchw[0].shape[0]
    H0, W0 = inputs_nchw[0].shape[2], inputs_nchw[0].shape[3]
    ys = []
    for (w, shift), x in zip(params["convs"], inputs_nchw):
        y = jnp.einsum("oc,nchw->nohw", w, x) + shift[None, :, None, None]
        y = jnp.maximum(y, 0.0)
        if y.shape[2:] != (H0, W0):
            y = jax.image.resize(y, (N, y.shape[1], H0, W0), method="bilinear")
        ys.append(y)
    cat = jnp.concatenate(ys, axis=1)
    wf_slices, shift_f = params["fusion"]
    wf_full = jnp.concatenate(wf_slices, axis=1)
    fused = jnp.maximum(
        jnp.einsum("oc,nchw->nohw", wf_full, cat) + shift_f[None, :, None, None], 0.0)
    wc, bc = params["cls"]
    return jnp.einsum("oc,nchw->nohw", wc, fused) + bc[None, :, None, None]


# ---------------------------------------------------------------------------
# Demo / smoke test
# ---------------------------------------------------------------------------
if __name__ == "__main__":
    key = jax.random.PRNGKey(0)
    kparams, kdata = jax.random.split(key)

    # Small synthetic SegFormer pyramid: 4 stages.
    in_channels = [8, 16, 32, 64]
    spatial = [16, 8, 4, 2]
    channels = 32
    num_classes = 2
    N = 2

    params = init_hard_mask_decoder_params(kparams, in_channels, channels,
                                           num_classes)

    dks = jax.random.split(kdata, len(in_channels))
    inputs = [
        jax.random.normal(dks[i], (N, in_channels[i], spatial[i], spatial[i]),
                          jnp.float32)
        for i in range(len(in_channels))
    ]

    out = hard_mask_decoder_forward(inputs, params)
    out = jax.block_until_ready(out)
    assert out.shape == (N, num_classes, spatial[0], spatial[0]), out.shape
    assert out.dtype == jnp.float32

    ref = jax.block_until_ready(reference_forward_f32(inputs, params))
    max_err = float(jnp.max(jnp.abs(out - ref)))
    assert max_err < 0.1, f"max abs error vs f32 reference too large: {max_err}"

    print("KERNEL_OK")
</pallas_src>

<mosaic_0001>
module attributes {stable_mosaic.version = 11 : i64} {
  func.func @_stage_conv_kernel(%arg0: i32, %arg1: i32, %arg2: memref<1x8x256xbf16, #tpu.memory_space<vmem>>, %arg3: memref<32x8xbf16, #tpu.memory_space<vmem>>, %arg4: memref<32x1xf32, #tpu.memory_space<vmem>>, %arg5: memref<1x32x256xbf16, #tpu.memory_space<vmem>>) attributes {dimension_semantics = [#tpu.dimension_semantics<parallel>, #tpu.dimension_semantics<parallel>], iteration_bounds = array<i64: 2, 1>, scalar_prefetch = 0 : i64, scratch_operands = 0 : i64, tpu.core_type = #tpu.core_type<tc>, window_params = [{transform_indices = @transform_0, window_bounds = array<i64: 1, 8, 256>}, {pipeline_mode = #tpu.pipeline_mode<synchronous>, transform_indices = @transform_1, window_bounds = array<i64: 32, 8>}, {pipeline_mode = #tpu.pipeline_mode<synchronous>, transform_indices = @transform_2, window_bounds = array<i64: 32, 1>}, {transform_indices = @transform_3, window_bounds = array<i64: 1, 32, 256>}]} {
    %c0 = arith.constant 0 : index
    %c0_0 = arith.constant 0 : index
    %0 = vector.load %arg3[%c0, %c0_0] : memref<32x8xbf16, #tpu.memory_space<vmem>>, vector<32x8xbf16>
    %c0_1 = arith.constant 0 : index
    %c0_2 = arith.constant 0 : index
    %c0_3 = arith.constant 0 : index
    %1 = vector.load %arg2[%c0_1, %c0_2, %c0_3] : memref<1x8x256xbf16, #tpu.memory_space<vmem>>, vector<1x8x256xbf16>
    %2 = vector.shape_cast %1 : vector<1x8x256xbf16> to vector<8x256xbf16>
    %cst = arith.constant dense<0.000000e+00> : vector<32x256xf32>
    %3 = tpu.matmul %0, %2, %cst {dimension_numbers = #tpu.dot_dimension_numbers<[1], [0], [0], [1], [0, 0, 1, 1], [], []>} : vector<32x8xbf16>, vector<8x256xbf16>, vector<32x256xf32> -> vector<32x256xf32>
    %c0_4 = arith.constant 0 : index
    %c0_5 = arith.constant 0 : index
    %4 = vector.load %arg4[%c0_4, %c0_5] : memref<32x1xf32, #tpu.memory_space<vmem>>, vector<32x1xf32>
    %5 = vector.broadcast %4 : vector<32x1xf32> to vector<32x256xf32>
    %6 = arith.addf %3, %5 : vector<32x256xf32>
    %cst_6 = arith.constant 0.000000e+00 : f32
    %7 = vector.broadcast %cst_6 : f32 to vector<32x256xf32>
    %8 = arith.maximumf %6, %7 : vector<32x256xf32>
    %9 = arith.truncf %8 : vector<32x256xf32> to vector<32x256xbf16>
    %c0_7 = arith.constant 0 : index
    %c0_8 = arith.constant 0 : index
    %c0_9 = arith.constant 0 : index
    %10 = vector.load %arg5[%c0_7, %c0_8, %c0_9] : memref<1x32x256xbf16, #tpu.memory_space<vmem>>, vector<1x32x256xbf16>
    %11 = vector.shape_cast %10 : vector<1x32x256xbf16> to vector<32x256xbf16>
    %12 = vector.shape_cast %9 : vector<32x256xbf16> to vector<1x32x256xbf16>
    tpu.vector_store %arg5[%c0_7, %c0_8, %c0_9], %12 {strides = array<i32>} : memref<1x32x256xbf16, #tpu.memory_space<vmem>>, vector<1x32x256xbf16>,
    return
  }
  func.func @transform_0(%arg0: i32, %arg1: i32) -> (i32, i32, i32) {
    %c0_i32 = arith.constant 0 : i32
    %c0_i32_0 = arith.constant 0 : i32
    return %arg0, %c0_i32, %arg1 : i32, i32, i32
  }
  func.func @transform_1(%arg0: i32, %arg1: i32) -> (i32, i32) {
    %c0_i32 = arith.constant 0 : i32
    %c0_i32_0 = arith.constant 0 : i32
    %c0_i32_1 = arith.constant 0 : i32
    return %c0_i32, %c0_i32_0 : i32, i32
  }
  func.func @transform_2(%arg0: i32, %arg1: i32) -> (i32, i32) {
    %c0_i32 = arith.constant 0 : i32
    %c0_i32_0 = arith.constant 0 : i32
    %c0_i32_1 = arith.constant 0 : i32
    return %c0_i32, %c0_i32_0 : i32, i32
  }
  func.func @transform_3(%arg0: i32, %arg1: i32) -> (i32, i32, i32) {
    %c0_i32 = arith.constant 0 : i32
    %c0_i32_0 = arith.constant 0 : i32
    return %arg0, %c0_i32, %arg1 : i32, i32, i32
  }
}

</mosaic_0001>

<llo_original>
// kernel: tpu_custom_call.1
$region0: #{tpu_custom_call.1}
  #allocation0 [shape = 'u32[]', space=smem, size = 0x4, offset = 0x4, fixed_abs, tag = 'smem constant byte address 0x4 - core index']
  #allocation1 [shape = 'u32[144,128]{1,0:T(1,128)}', space=vmem, size = 0x12000, scoped, tag = 'internal scratch']
  %s0 = inlined_call_operand.vmem [shape: bf16[2,8,256], index: 0, kind: input, shape index: {}]
  %s1 = inlined_call_operand.vmem [shape: bf16[32,8], index: 1, kind: input, shape index: {}]
  %s2 = inlined_call_operand.vmem [shape: f32[32,1], index: 2, kind: input, shape index: {}]
  %s3 = inlined_call_operand.hbm [shape: bf16[2,32,256], index: 3, kind: output, shape index: {}]
  %s4 = sld [smem:[#allocation0]]
  $region45: #{tpu_custom_call.1} parent=0
    _
  %s6 = ssub.s32 1, %s4
  %s7 = scalar_select 0, %s6, %s4
  $region1: #{tpu_custom_call.1} parent=0
    #allocation2 [shape = 'u8[32768]{0}', space=vmem, size = 0x8000, scoped, tag = 'output window, operand 0']
    #allocation3 [shape = 's32[2]{0}', space=sflag, size = 0x8, scoped, tag = 'scoped memory for tpu_custom_call.1']
    %8 = vsyncpa [#allocation3], 0
    %s9 = scalar_lea.sflag [#allocation3], 1
    %10 = vsyncpa %s9, 0
    loop: start=0, step=1, limit=4
    $region2: #{tpu_custom_call.1} parent=1 // loop_pre_header
      _
    $region3: #{tpu_custom_call.1} parent=1 // loop_header
      %s12 = sphi 0, %s16
      %p13 = scmp.ge.s32.totalorder %s12, 4
      %s19 = sphi 0, %s31
      %s20 = sphi 0, %s27
      %s21 = sphi 0, %s19
      %s22 = sphi 0, %s20
      %s23 = sphi 0, %s21
      %s24 = sphi 0, %s22
      %s36 = sphi 0, %s38
      %s39 = sphi 0, %s36
      %s40 = sphi 0, %s39
      %s56 = sphi 0, %s40
      %s60 = sphi 0, %s60
      %s62 = sphi 0, %s60
      %s63 = sphi 0, %s62
      %s77 = sphi 0, %s63
      %s81 = sphi 0, %s81
      %s83 = sphi 0, %s81
      %s84 = sphi 0, %s83
      %s98 = sphi 0, %s84
      %s106 = sphi 0, %s108
      %s109 = sphi 0, %s106
      %s110 = sphi 0, %s109
      %s126 = sphi 0, %s110
    $region4: #{tpu_custom_call.1} parent=1 // loop_header_branch
      %15 = sbr.rel (%p13) target = $region8
    $region5: #{tpu_custom_call.1} parent=1 // loop_body
      %s17 = ssub.s32 %s12, 1
      %s18 = ssub.s32 %s12, 2
      %s25 = sadd.s32 1, %s20
      %p26 = scmp.ge.s32.totalorder %s25, 1
      %s27 = scalar_select %p26, 0, %s25
      %s28 = sadd.s32 1, %s19
      %s29 = scalar_select %p26, %s28, %s19
      %p30 = scmp.ge.s32.totalorder %s29, 2
      %s31 = scalar_select %p30, 0, %s29
      %s32 = ssub.s32 %s19, %s31
      %s33 = ssub.s32 %s20, %s27
      %s34 = sor.u32 %s32, %s33
      %p35 = scmp.eq.s32.totalorder %s34, 0
      %s37 = sadd.s32 %s36, 1
      %s38 = scalar_select %p35, %s36, %s37
      %p41 = pneg %p35
      %p42 = scmp.eq.s32.totalorder %s12, 1
      %p43 = por %p41, %p42
      %p44 = scmp.ne.s32.totalorder %s36, %s39
      %p45 = scmp.eq.s32.totalorder %s12, 0
      %p46 = por %p44, %p45
      %p47 = scmp.ne.s32.totalorder %s36, %s39
      %p48 = scmp.eq.s32.totalorder %s17, 1
      %p49 = por %p47, %p48
      %p50 = scmp.ne.s32.totalorder %s39, %s40
      %p51 = scmp.eq.s32.totalorder %s17, 0
      %p52 = por %p50, %p51
      %p53 = scmp.ne.s32.totalorder %s39, %s40
      %p54 = scmp.eq.s32.totalorder %s18, 1
      %p55 = por %p53, %p54
      %p57 = scmp.ne.s32.totalorder %s40, %s56
      %p58 = scmp.eq.s32.totalorder %s18, 0
      %p59 = por %p57, %p58
      %s61 = sadd.s32 %s60, 1
      %p64 = scmp.eq.s32.totalorder %s12, 1
      %p65 = scmp.ne.s32.totalorder %s60, %s62
      %p66 = scmp.eq.s32.totalorder %s12, 0
      %p67 = por %p65, %p66
      %p68 = scmp.ne.s32.totalorder %s60, %s62
      %p69 = scmp.eq.s32.totalorder %s17, 1
      %p70 = por %p68, %p69
      %p71 = scmp.ne.s32.totalorder %s62, %s63
      %p72 = scmp.eq.s32.totalorder %s17, 0
      %p73 = por %p71, %p72
      %p74 = scmp.ne.s32.totalorder %s62, %s63
      %p75 = scmp.eq.s32.totalorder %s18, 1
      %p76 = por %p74, %p75
      %p78 = scmp.ne.s32.totalorder %s63, %s77
      %p79 = scmp.eq.s32.totalorder %s18, 0
      %p80 = por %p78, %p79
      %s82 = sadd.s32 %s81, 1
      %p85 = scmp.eq.s32.totalorder %s12, 1
      %p86 = scmp.ne.s32.totalorder %s81, %s83
      %p87 = scmp.eq.s32.totalorder %s12, 0
      %p88 = por %p86, %p87
      %p89 = scmp.ne.s32.totalorder %s81, %s83
      %p90 = scmp.eq.s32.totalorder %s17, 1
      %p91 = por %p89, %p90
      %p92 = scmp.ne.s32.totalorder %s83, %s84
      %p93 = scmp.eq.s32.totalorder %s17, 0
      %p94 = por %p92, %p93
      %p95 = scmp.ne.s32.totalorder %s83, %s84
      %p96 = scmp.eq.s32.totalorder %s18, 1
      %p97 = por %p95, %p96
      %p99 = scmp.ne.s32.totalorder %s84, %s98
      %p100 = scmp.eq.s32.totalorder %s18, 0
      %p101 = por %p99, %p100
      %s102 = ssub.s32 %s19, %s31
      %s103 = ssub.s32 %s20, %s27
      %s104 = sor.u32 %s102, %s103
      %p105 = scmp.eq.s32.totalorder %s104, 0
      %s107 = sadd.s32 %s106, 1
      %s108 = scalar_select %p105, %s106, %s107
      %p111 = pneg %p105
      %p112 = scmp.eq.s32.totalorder %s12, 1
      %p113 = por %p111, %p112
      %p114 = scmp.ne.s32.totalorder %s106, %s109
      %p115 = scmp.eq.s32.totalorder %s12, 0
      %p116 = por %p114, %p115
      %p117 = scmp.ne.s32.totalorder %s106, %s109
      %p118 = scmp.eq.s32.totalorder %s17, 1
      %p119 = por %p117, %p118
      %p120 = scmp.ne.s32.totalorder %s109, %s110
      %p121 = scmp.eq.s32.totalorder %s17, 0
      %p122 = por %p120, %p121
      %p123 = scmp.ne.s32.totalorder %s109, %s110
      %p124 = scmp.eq.s32.totalorder %s18, 1
      %p125 = por %p123, %p124
      %p127 = scmp.ne.s32.totalorder %s110, %s126
      %p128 = scmp.eq.s32.totalorder %s18, 0
      %p129 = por %p127, %p128
      %p130 = scmp.le.s32.totalorder 1, %s12
      %p131 = scmp.lt.s32.totalorder %s12, 3
      %p132 = pnand %p130, %p131
      %p133 = pneg %p132
      // Predicated region
      $region9: #{tpu_custom_call.1} parent=5 // pred_check
        _
      $region10: #{tpu_custom_call.1} parent=5 // pred_check_branch
        %135 = sbr.rel (%p132) target = $region12
      $region11: #{tpu_custom_call.1} parent=5 // pred_region
        %s136 = ssub.s32 %s12, 1
        // Predicated region
        $region13: #{tpu_custom_call.1} parent=11 // pred_check
          %p137 = pneg %p73
        $region14: #{tpu_custom_call.1} parent=11 // pred_check_branch
          %139 = sbr.rel (%p137) target = $region16
        $region15: #{tpu_custom_call.1} parent=11 // pred_region
          _
        $region16: #{tpu_custom_call.1} parent=11 // pred_fallthru
          _
        // Predicated region
        $region17: #{tpu_custom_call.1} parent=11 // pred_check
          %p140 = pneg %p94
        $region18: #{tpu_custom_call.1} parent=11 // pred_check_branch
          %142 = sbr.rel (%p140) target = $region20
        $region19: #{tpu_custom_call.1} parent=11 // pred_region
          _
        $region20: #{tpu_custom_call.1} parent=11 // pred_fallthru
          _
      $region12: #{tpu_custom_call.1} parent=5 // pred_fallthru
        _
      %p143 = scmp.lt.s32.totalorder %s12, 2
      // Predicated region
      $region21: #{tpu_custom_call.1} parent=5 // pred_check
        %p144 = pneg %p143
      $region22: #{tpu_custom_call.1} parent=5 // pred_check_branch
        %146 = sbr.rel (%p144) target = $region24
      $region23: #{tpu_custom_call.1} parent=5 // pred_region
        // Predicated region
        $region25: #{tpu_custom_call.1} parent=23 // pred_check
          %p147 = pneg %p46
        $region26: #{tpu_custom_call.1} parent=23 // pred_check_branch
          %149 = sbr.rel (%p147) target = $region28
        $region27: #{tpu_custom_call.1} parent=23 // pred_region
          %s150 = smul.u32 2, %s20
          %p151 = scmp.lt.s32.totalorder %s19, 1
          %s152 = scalar_select %p151, %s19, 1
          %p153 = scmp.lt.s32.totalorder %s150, 1
          %s154 = scalar_select %p153, %s150, 1
          %s155 = smul.addr %s152, 2
          %s156 = sadd.s32 %s154, %s155
          %s157 = smul.addr %s156, 4
          %s158 = scalar_lea.vmem %s0, %s157
          %s159 = smul.u32 2, %s20
        $region28: #{tpu_custom_call.1} parent=23 // pred_fallthru
          _
      $region24: #{tpu_custom_call.1} parent=5 // pred_fallthru
        _
      %p160 = scmp.le.s32.totalorder 1, %s12
      %p161 = scmp.lt.s32.totalorder %s12, 3
      %p162 = pnand %p160, %p161
      %p163 = pneg %p162
      // Predicated region
      $region29: #{tpu_custom_call.1} parent=5 // pred_check
        _
      $region30: #{tpu_custom_call.1} parent=5 // pred_check_branch
        %165 = sbr.rel (%p162) target = $region32
      $region31: #{tpu_custom_call.1} parent=5 // pred_region
        %s166 = ssub.s32 %s12, 1
        %s167 = smul.u32 2, %s22
        %p168 = scmp.lt.s32.totalorder %s21, 1
        %s169 = scalar_select %p168, %s21, 1
        %p170 = scmp.lt.s32.totalorder %s167, 1
        %s171 = scalar_select %p170, %s167, 1
        %s172 = smul.addr %s169, 2
        %s173 = sadd.s32 %s171, %s172
        %s174 = smul.addr %s173, 4
        %s175 = scalar_lea.vmem %s0, %s174
        %p176 = pneg %p52
        %p177 = pneg %p49
        %p178 = pneg %p73
        %p179 = pneg %p70
        %p180 = pneg %p94
        %p181 = pneg %p91
        %p182 = pneg %p122
        %p183 = pneg %p119
        %s184 = sand.u32 %s109, 1
        %s185 = scalar_lea.sflag [#allocation3], %s184
        %s186 = sand.u32 %s109, 1
        %s187 = smul.addr %s186, 32
        %s188 = scalar_lea.vmem [#allocation2], %s187
        %s189 = smul.u32 2, %s22
        %p190 = scmp.lt.s32.totalorder %s21, 1
        %s191 = scalar_select %p190, %s21, 1
        %p192 = scmp.lt.s32.totalorder %s189, 1
        %s193 = scalar_select %p192, %s189, 1
        %s194 = smul.addr %s191, 2
        %s195 = sadd.s32 %s193, %s194
        %s196 = smul.addr %s195, 4
        %s197 = scalar_lea.vmem %s0, %s196
        %s198 = smul.u32 2, %s22
        %s199 = smul.u32 2, %s22
        %v201 = vld [vmem:[%s1] sm:$0xf]
        %v202 = vld [vmem:[%s1 + $0x4] sm:$0xf]
        %v203 = vld [vmem:[%s1 + $0x8] sm:$0xf]
        %v204 = vld [vmem:[%s1 + $0xc] sm:$0xf]
        %v205 = vld [vmem:[%s197] sm:$0xff]
        %v206 = vld [vmem:[%s2] sm:$0xff]
        %v207 = vld [vmem:[%s2 + $0x8] sm:$0xff]
        %v208 = vld [vmem:[%s2 + $0x10] sm:$0xff]
        %v209 = vld [vmem:[%s2 + $0x18] sm:$0xff]
        %211 = vset.pattern.permute.xlu0 0
        %212 = vperm.xlu0 %211, %v206
        %v213 = vpop.permute.xlu0 %212
        %216 = vset.pattern.permute.xlu0 0
        %217 = vperm.xlu0 %216, %v207
        %v218 = vpop.permute.xlu0 %217
        %221 = vset.pattern.permute.xlu0 0
        %222 = vperm.xlu0 %221, %v208
        %v223 = vpop.permute.xlu0 %222
        %226 = vset.pattern.permute.xlu0 0
        %227 = vperm.xlu0 %226, %v209
        %v228 = vpop.permute.xlu0 %227
        %v234 = vunpack.c.l.b16 %v201
        %v235 = vunpack.c.l.b16 %v202
        %v236 = vunpack.c.l.b16 %v203
        %v237 = vunpack.c.l.b16 %v204
        %v238 = vpack.c.b16 %v235, %v234
        %v239 = vpack.c.b16 %v237, %v236
        %v241 = vunpack.c.l.b16 %v205
        %v242 = vunpack.c.h.b16 %v205
        %v243 = vpack.c.b16 %v241, %v241
        %v244 = vpack.c.b16 %v242, %v242
        %vm245 = vcmask 64512
        %v247 = vsel %vm245, %v238, 0
        %v250 = vsel %vm245, %v239, 0
        %vm252 = vcmask 1043456
        %v254 = vsel %vm252, %v243, 0
        %v257 = vsel %vm252, %v244, 0
        %259 = vmatprep.subr.bf16.mxu0 %v257
        %260 = vmatpush1.bf16.msra.mxu0 %v254
        %261 = vmatprep.subr.bf16.mxu0 0
        %262 = vmatpush1.bf16.msra.mxu0 0
        %263 = vmatprep.subr.bf16.mxu0 0
        %264 = vmatpush1.bf16.msra.mxu0 0
        %265 = vmatprep.subr.bf16.mxu0 0
        %266 = vmatpush1.bf16.msra.mxu0 0
        %267 = vmatprep.subr.bf16.mxu0 0
        %268 = vmatpush1.bf16.msra.mxu0 0
        %269 = vmatprep.subr.bf16.mxu0 0
        %270 = vmatpush1.bf16.msra.mxu0 0
        %271 = vmatprep.subr.bf16.mxu0 0
        %272 = vmatpush1.bf16.msra.mxu0 0
        %273 = vmatprep.subr.bf16.mxu0 0
        %274 = vmatpush1.bf16.msra.mxu0 0
        %275 = vmatprep.subr.bf16.mxu0 0
        %276 = vmatpush1.bf16.msra.mxu0 0
        %277 = vmatprep.subr.bf16.mxu0 0
        %278 = vmatpush1.bf16.msra.mxu0 0
        %279 = vmatprep.subr.bf16.mxu0 0
        %280 = vmatpush1.bf16.msra.mxu0 0
        %281 = vmatprep.subr.bf16.mxu0 0
        %282 = vmatpush1.bf16.msra.mxu0 0
        %283 = vmatprep.subr.bf16.mxu0 0
        %284 = vmatpush1.bf16.msra.mxu0 0
        %285 = vmatprep.subr.bf16.mxu0 0
        %286 = vmatpush1.bf16.msra.mxu0 0
        %287 = vmatprep.subr.bf16.mxu0 0
        %288 = vmatpush1.bf16.msra.mxu0 0
        %289 = vmatprep.subr.bf16.mxu0 0
        %290 = vmatpush1.bf16.msra.mxu0 0
        %291 = vmatprep.mubr.bf16.mxu0 0
        %292 = vmatmul.mubr.bf16.gmra.mrb[0].mxu0 %v247
        %v293 = vpop.f32.mrb[0].mxu0
        %v294 = vadd.f32 %v213, %v293
        %v295 = vpop.f32.mrb[0].mxu0
        %v296 = vadd.f32 %v213, %v295
        %v297 = vpop.f32.mrb[0].mxu0
        %v298 = vadd.f32 %v218, %v297
        %v299 = vpop.f32.mrb[0].mxu0
        %v300 = vadd.f32 %v218, %v299
        %301 = vmatprep.mubr.bf16.mxu0 0
        %302 = vmatmul.mubr.bf16.gmra.mrb[0].mxu0 %v250
        %v303 = vpop.f32.mrb[0].mxu0
        %v304 = vadd.f32 %v223, %v303
        %v305 = vpop.f32.mrb[0].mxu0
        %v306 = vadd.f32 %v223, %v305
        %v307 = vpop.f32.mrb[0].mxu0
        %v308 = vadd.f32 %v228, %v307
        %v309 = vpop.f32.mrb[0].mxu0
        %v310 = vadd.f32 %v228, %v309
        %311 = vdwg.mxu0
        %v312 = vmax.f32 %v294, 0.0
        %v313 = vmax.f32 %v296, 0.0
        %v314 = vmax.f32 %v298, 0.0
        %v315 = vmax.f32 %v300, 0.0
        %v316 = vmax.f32 %v304, 0.0
        %v317 = vmax.f32 %v306, 0.0
        %v318 = vmax.f32 %v308, 0.0
        %v319 = vmax.f32 %v310, 0.0
        %v320 = vpack.c.bf16 %v314, %v312
        %v321 = vpack.c.bf16 %v315, %v313
        %v322 = vpack.c.bf16 %v318, %v316
        %v323 = vpack.c.bf16 %v319, %v317
        %v328 = vunpack.c.l.b16 %v320
        %v329 = vunpack.c.l.b16 %v321
        %v330 = vunpack.c.h.b16 %v320
        %v331 = vunpack.c.h.b16 %v321
        %v332 = vunpack.c.l.b16 %v322
        %v333 = vunpack.c.l.b16 %v323
        %v334 = vunpack.c.h.b16 %v322
        %v335 = vunpack.c.h.b16 %v323
        %v336 = vpack.c.b16 %v329, %v328
        %v337 = vpack.c.b16 %v331, %v330
        %v338 = vpack.c.b16 %v333, %v332
        %v339 = vpack.c.b16 %v335, %v334
        %344 = vst [vmem:[%s188] sm:$0xff] %v336
        %345 = vst [vmem:[%s188 + $0x8] sm:$0xff] %v337
        %346 = vst [vmem:[%s188 + $0x10] sm:$0xff] %v338
        %347 = vst [vmem:[%s188 + $0x18] sm:$0xff] %v339
        %s348 = sand.u32 %s109, 1
        %s349 = scalar_lea.sflag [#allocation3], %s348
        %s350 = sand.u32 %s109, 1
        %s351 = smul.addr %s350, 32
        %s352 = scalar_lea.vmem [#allocation2], %s351
        // Predicated region
        $region33: #{tpu_custom_call.1} parent=31 // pred_check
          %p353 = pneg %p119
        $region34: #{tpu_custom_call.1} parent=31 // pred_check_branch
          %355 = sbr.rel (%p353) target = $region36
        $region35: #{tpu_custom_call.1} parent=31 // pred_region
          %s356 = smul.u32 2, %s22
          %s358 = ssub.s32 512, 512
          %359 = vsyncadd %s349, %s358
          %s360 = smul.addr %s21, 8
          %s361 = sadd.s32 %s356, %s360
          %s362 = smul.addr %s361, 64
          %s363 = scalar_lea.hbm %s3, %s362
          %s364 = sshll.u32 %s352, 4
          %s365 = int_to_ptr.vmem [resolvable:$true] %s364
          %370 = dma.vmem_to_hbm [thread:$0]  %s365, 512, %s363, %s349, 128, 128, 8
        $region36: #{tpu_custom_call.1} parent=31 // pred_fallthru
          _
      $region32: #{tpu_custom_call.1} parent=5 // pred_fallthru
        _
      %p371 = scmp.le.s32.totalorder 2, %s12
      // Predicated region
      $region37: #{tpu_custom_call.1} parent=5 // pred_check
        %p372 = pneg %p371
      $region38: #{tpu_custom_call.1} parent=5 // pred_check_branch
        %374 = sbr.rel (%p372) target = $region40
      $region39: #{tpu_custom_call.1} parent=5 // pred_region
        %s375 = ssub.s32 %s12, 2
        // Predicated region
        $region41: #{tpu_custom_call.1} parent=39 // pred_check
          %p376 = pneg %p125
        $region42: #{tpu_custom_call.1} parent=39 // pred_check_branch
          %378 = sbr.rel (%p376) target = $region44
        $region43: #{tpu_custom_call.1} parent=39 // pred_region
          %s379 = sand.u32 %s110, 1
          %s380 = scalar_lea.sflag [#allocation3], %s379
          %s381 = sand.u32 %s110, 1
          %s382 = smul.addr %s381, 32
          %s383 = scalar_lea.vmem [#allocation2], %s382
          %384 = dma.done %s380, 512
        $region44: #{tpu_custom_call.1} parent=39 // pred_fallthru
          _
      $region40: #{tpu_custom_call.1} parent=5 // pred_fallthru
        _
    $region6: #{tpu_custom_call.1} parent=1 // loop_footer
      %s16 = sadd.s32 1, %s12
    $region7: #{tpu_custom_call.1} parent=1 // loop_footer_branch
      %11 = sbr.rel target = $region3
    $region8: #{tpu_custom_call.1} parent=1 // loop_exit
      _
    %385 = vsyncpa [#allocation3], 1
    %s386 = scalar_lea.sflag [#allocation3], 1
    %387 = vsyncpa %s386, 1

</llo_original>
